<compile_context>
chip_gen: v7x
topology: tpu7x:2x2x1
jax: 0.10.0
libtpu: 0.0.40
codegen_flags: <defaults>
</compile_context>

<pallas_src>
import jax
import jax.numpy as jnp
from jax.experimental import pallas as pl
from jax.experimental.pallas import tpu as pltpu


# -----------------------------------------------------------------------------
# Hardware probing (best-effort; safe fallbacks)
# -----------------------------------------------------------------------------
def _tpu_vmem_capacity():
    try:
        info = pltpu.get_tpu_info()
        cap = getattr(info, "vmem_capacity_bytes", None)
        if cap:
            return int(cap)
    except Exception:
        pass
    return 64 << 20          # conservative fallback = v7x per-TensorCore VMEM


def _num_tensorcores():
    # v7x exposes 2 TensorCores per chip (sharded via "parallel" grid axes);
    # v5e/v6e have 1. Heuristic only -- affects dispatch, never correctness.
    try:
        kind = str(jax.devices()[0].device_kind).lower()
    except Exception:
        return 1
    return 2 if ("v7" in kind or "tpu7" in kind) else 1


def _vmem_limit(block_bytes, weight_bytes, usable):
    # ~2 double-buffered input blocks + 2 output blocks + ~2 block-sized
    # elementwise temps (gate, gated product) + weights + headroom.
    need = 6 * block_bytes + 2 * weight_bytes + (2 << 20)
    return int(min(max(need, 16 << 20), usable))


# -----------------------------------------------------------------------------
# Path 1: fused single-pass kernel; block = (Bt, C, HW)
# -----------------------------------------------------------------------------
def _scse_fused_kernel(x_ref, w1_ref, b1_ref, w2_ref, b2_ref, ws_ref, bs_ref,
                       o_ref):
    x = x_ref[...]                                   # (Bt, C, HW), input dtype
    bt, _, hw = x.shape

    # --- cSE: global average pool -> 1x1 conv -> relu -> 1x1 conv -> sigmoid
    if x.dtype == jnp.float32:
        pooled = jnp.mean(x, axis=-1, keepdims=True)              # (Bt, C, 1) f32
    else:
        # bf16: accumulate the mean in f32 on the MXU (avoids an f32 copy of x).
        ones = jnp.full((bt, hw, 1), 1.0 / hw, dtype=x.dtype)
        pooled = jnp.einsum("bch,bho->bco", x, ones,
                            preferred_element_type=jnp.float32)   # (Bt, C, 1)

    w1 = jnp.broadcast_to(w1_ref[...], (bt,) + w1_ref.shape)      # (Bt, Cr, C)
    w2 = jnp.broadcast_to(w2_ref[...], (bt,) + w2_ref.shape)      # (Bt, C, Cr)
    z1 = jnp.einsum("brc,bcx->brx", w1, pooled,
                    preferred_element_type=jnp.float32) + b1_ref[...]
    z1 = jnp.maximum(z1, 0.0)
    z2 = jnp.einsum("bcr,brx->bcx", w2, z1,
                    preferred_element_type=jnp.float32) + b2_ref[...]
    cse = jax.nn.sigmoid(z2)                                      # (Bt, C, 1) f32

    # --- sSE: 1x1 conv C->1 over all pixels, lane-dense output
    ws = jnp.broadcast_to(ws_ref[...].astype(x.dtype), (bt,) + ws_ref.shape)
    s = jnp.einsum("boc,bch->boh", ws, x,
                   preferred_element_type=jnp.float32) + bs_ref[...]
    sse = jax.nn.sigmoid(s)                                       # (Bt, 1, HW) f32

    # --- fused gating: x*cse + x*sse == x * (cse + sse)
    gate = cse.astype(x.dtype) + sse.astype(x.dtype)              # (Bt, C, HW)
    o_ref[...] = (x * gate).astype(o_ref.dtype)


def _pick_batch_tile(n, per_image_bytes, limit, cores):
    bt = max(int(limit // max(per_image_bytes, 1)), 1)
    if cores > 1:
        bt = min(bt, -(-n // cores))        # keep >= cores grid steps if possible
    bt = max(min(bt, n), 1)
    while n % bt:                           # full blocks only (simple & safe)
        bt -= 1
    return bt


def _scse_fused(x, params, bt, usable):
    n, c, hw = x.shape
    w1, b1, w2, b2, ws, bs = (params[k] for k in ("w1", "b1", "w2", "b2", "ws", "bs"))
    cr = w1.shape[0]
    steps = n // bt
    itemsize = x.dtype.itemsize
    block_bytes = bt * c * hw * itemsize
    weight_bytes = sum(int(a.size * a.dtype.itemsize) for a in (w1, b1, w2, b2, ws, bs))
    cost = pl.CostEstimate(flops=int(4 * n * c * hw),
                           transcendentals=int(n * (c + hw)),
                           bytes_accessed=int(2 * n * c * hw * itemsize + weight_bytes))

    full = lambda shape: pl.BlockSpec(shape, lambda i: (0,) * len(shape))
    return pl.pallas_call(
        _scse_fused_kernel,
        out_shape=jax.ShapeDtypeStruct((n, c, hw), x.dtype),
        grid_spec=pltpu.PrefetchScalarGridSpec(
            num_scalar_prefetch=0,
            grid=(steps,),
            in_specs=[
                pl.BlockSpec((bt, c, hw), lambda i: (i, 0, 0)),   # x
                full((cr, c)), full((cr, 1)),                     # W1, b1
                full((c, cr)), full((c, 1)),                      # W2, b2
                full((1, c)), full((1, 1)),                       # Ws, bs
            ],
            out_specs=pl.BlockSpec((bt, c, hw), lambda i: (i, 0, 0)),
        ),
        compiler_params=pltpu.CompilerParams(
            dimension_semantics=("parallel",),
            vmem_limit_bytes=_vmem_limit(block_bytes, weight_bytes, usable)),
        cost_estimate=cost,
    )(x, w1, b1, w2, b2, ws, bs)


# -----------------------------------------------------------------------------
# Path 2: precomputed cSE gate (plain XLA) + HW-tiled apply kernel
# -----------------------------------------------------------------------------
def _scse_apply_kernel(x_ref, cse_ref, ws_ref, bs_ref, o_ref):
    x = x_ref[0]                                                  # (C, THW)
    cse = cse_ref[0]                                              # (C, 1) f32
    s = jnp.dot(ws_ref[...].astype(x.dtype), x,
                preferred_element_type=jnp.float32) + bs_ref[...] # (1, THW) f32
    sse = jax.nn.sigmoid(s)
    gate = cse.astype(x.dtype) + sse.astype(x.dtype)              # (C, THW)
    o_ref[0] = (x * gate).astype(o_ref.dtype)


def _cse_gate(x, params):
    """Tiny cSE gate in plain XLA: (N, C, 1) float32."""
    xf = x.astype(jnp.float32)
    pooled = jnp.mean(xf, axis=2)                                 # (N, C)
    z1 = jnp.maximum(pooled @ params["w1"].T + params["b1"][:, 0], 0.0)
    z2 = z1 @ params["w2"].T + params["b2"][:, 0]
    return jax.nn.sigmoid(z2)[:, :, None]


def _pick_hw_tile(hw, c, itemsize, limit, min_tiles=1):
    """Lane-tile for the apply kernel: multiple of 128 (prefer >=512), need not
    divide HW (last tile may be partial -- no reduction over HW in the kernel)."""
    budget_lanes = max(limit // (c * itemsize), 128)
    cap_lanes = hw if min_tiles <= 1 else max(-(-hw // min_tiles), 128)
    lanes = min(budget_lanes, cap_lanes)
    if lanes >= hw and min_tiles <= 1:
        return hw                       # whole row fits: fully lane-dense
    t = (lanes // 512) * 512            # wide tiles -> unmasked stores, good DMA
    if t == 0:
        t = (lanes // 128) * 128
    if t == 0:
        t = 128
    return t


def _scse_apply(x, cse, params, block_bytes_limit, usable, min_tiles=1):
    n, c, hw = x.shape
    ws, bs = params["ws"], params["bs"]
    itemsize = x.dtype.itemsize
    thw = _pick_hw_tile(hw, c, itemsize, block_bytes_limit, min_tiles)
    n_hw = pl.cdiv(hw, thw)
    block_bytes = c * thw * itemsize
    weight_bytes = int(ws.size * ws.dtype.itemsize + bs.size * bs.dtype.itemsize
                       + 4 * c * cse.dtype.itemsize)
    cost = pl.CostEstimate(flops=int(4 * n * c * hw),
                           transcendentals=int(n * hw),
                           bytes_accessed=int(2 * n * c * hw * itemsize + n * c * 4))

    full = lambda shape: pl.BlockSpec(shape, lambda t, b: (0,) * len(shape))
    return pl.pallas_call(
        _scse_apply_kernel,
        out_shape=jax.ShapeDtypeStruct((n, c, hw), x.dtype),
        grid_spec=pltpu.PrefetchScalarGridSpec(
            num_scalar_prefetch=0,
            # Large (tileable) axis first so core sharding stays busy even at N=1.
            grid=(n_hw, n),
            in_specs=[
                pl.BlockSpec((1, c, thw), lambda t, b: (b, 0, t)),   # x tile
                pl.BlockSpec((1, c, 1), lambda t, b: (b, 0, 0)),     # cSE gate
                full((1, c)), full((1, 1)),                          # Ws, bs
            ],
            out_specs=pl.BlockSpec((1, c, thw), lambda t, b: (b, 0, t)),
        ),
        compiler_params=pltpu.CompilerParams(
            dimension_semantics=("parallel", "parallel"),
            vmem_limit_bytes=_vmem_limit(block_bytes, weight_bytes, usable)),
        cost_estimate=cost,
    )(x, cse, ws, bs)


# -----------------------------------------------------------------------------
# Public wrapper: matches SCSEModule.forward (NCHW in, NCHW out)
# -----------------------------------------------------------------------------
def scse_module(x_nchw, params, *, block_bytes_limit=None):
    n, c, h, w = x_nchw.shape
    hw = h * w
    x = x_nchw.reshape(n, c, hw)          # free view; no layout transposes

    cap = _tpu_vmem_capacity()
    usable = int(cap * 0.8)               # never request all of per-core VMEM
    if block_bytes_limit is None:
        # 6x block (in/out double-buffers + elementwise temps) must fit `usable`:
        # ~8 MiB on v7x (64 MiB/core), ~16 MiB on v5e/v6e (128 MiB).
        block_bytes_limit = max((usable - (4 << 20)) // 6, 2 << 20)
    cores = _num_tensorcores()

    per_image = c * hw * x.dtype.itemsize
    use_fused = per_image <= block_bytes_limit
    min_tiles, bt = 1, 1
    if use_fused:
        bt = _pick_batch_tile(n, per_image, block_bytes_limit, cores)
        steps = n // bt
        if cores > 1 and steps < cores and hw >= 256:
            # v7x with N too small to shard: 3 HBM passes on 2 cores beats
            # 2 passes on 1 core for a memory-bound op.
            use_fused = False
            min_tiles = cores

    if use_fused:
        out = _scse_fused(x, params, bt, usable)
    else:
        cse = _cse_gate(x, params)
        out = _scse_apply(x, cse, params, block_bytes_limit, usable, min_tiles)
    return out.reshape(n, c, h, w)


def init_params(key, in_channels, reduction=16):
    cr = max(in_channels // reduction, 1)
    k1, k2, k3, k4, k5, k6 = jax.random.split(key, 6)
    # PyTorch Conv2d(in, out, 1) weights stored as (out, in); biases as (out, 1).
    w1 = jax.random.normal(k1, (cr, in_channels), jnp.float32) * 0.1
    b1 = jax.random.normal(k2, (cr, 1), jnp.float32) * 0.1
    w2 = jax.random.normal(k3, (in_channels, cr), jnp.float32) * 0.1
    b2 = jax.random.normal(k4, (in_channels, 1), jnp.float32) * 0.1
    ws = jax.random.normal(k5, (1, in_channels), jnp.float32) * 0.1
    bs = jax.random.normal(k6, (1, 1), jnp.float32) * 0.1
    return {"w1": w1, "b1": b1, "w2": w2, "b2": b2, "ws": ws, "bs": bs}


def scse_reference(x_nchw, params):
    """Pure-JAX f32 reference mirroring the PyTorch forward (NCHW)."""
    xf = x_nchw.astype(jnp.float32)
    pooled = jnp.mean(xf, axis=(2, 3))                                  # (N, C)
    z1 = jnp.maximum(pooled @ params["w1"].T + params["b1"][:, 0], 0.0)
    cse = jax.nn.sigmoid(z1 @ params["w2"].T + params["b2"][:, 0])[:, :, None, None]
    s = jnp.einsum("nchw,oc->nohw", xf, params["ws"]) + params["bs"][0, 0]
    sse = jax.nn.sigmoid(s)
    return xf * cse + xf * sse


if __name__ == "__main__":
    key = jax.random.PRNGKey(0)
    kx, kp = jax.random.split(key)

    N, C, H, W = 2, 32, 16, 16       # in_channels=32, reduction=16 -> Cr=2
    x = jax.random.normal(kx, (N, C, H, W), jnp.float32)
    params = init_params(kp, C, reduction=16)
    ref = scse_reference(x, params)

    # Fused single-pass path (default). Tolerance covers differing matmul
    # rounding between the in-kernel MXU dot and the XLA reference at default
    # TPU matmul precision.
    out = jax.block_until_ready(scse_module(x, params))
    assert out.shape == x.shape and out.dtype == x.dtype
    assert jnp.allclose(out, ref, atol=5e-3, rtol=5e-3), "fused mismatch"

    # Two-pass / HW-tiled path (forced via a tiny block budget): the fallback
    # used for large images (and N==1 on v7x); verify it matches too.
    out_tiled = jax.block_until_ready(
        scse_module(x, params, block_bytes_limit=C * 128 * 4))
    assert jnp.allclose(out_tiled, ref, atol=5e-3, rtol=5e-3), "tiled mismatch"

    # bf16 end-to-end (halves HBM traffic for this memory-bound op).
    xb = x.astype(jnp.bfloat16)
    ref_b = scse_reference(xb, params)
    out_b = jax.block_until_ready(scse_module(xb, params))
    assert out_b.dtype == jnp.bfloat16
    assert jnp.allclose(out_b.astype(jnp.float32), ref_b, atol=1e-1, rtol=1e-1), \
        "bf16 mismatch"

    print("KERNEL_OK")
</pallas_src>

<mosaic_0001>
module attributes {stable_mosaic.version = 11 : i64} {
  func.func @_scse_fused_kernel(%arg0: i32, %arg1: memref<2x32x256xf32, #tpu.memory_space<vmem>>, %arg2: memref<2x32xf32, #tpu.memory_space<vmem>>, %arg3: memref<2x1xf32, #tpu.memory_space<vmem>>, %arg4: memref<32x2xf32, #tpu.memory_space<vmem>>, %arg5: memref<32x1xf32, #tpu.memory_space<vmem>>, %arg6: memref<1x32xf32, #tpu.memory_space<vmem>>, %arg7: memref<1x1xf32, #tpu.memory_space<vmem>>, %arg8: memref<2x32x256xf32, #tpu.memory_space<vmem>>) attributes {dimension_semantics = [#tpu.dimension_semantics<parallel>], iteration_bounds = array<i64: 1>, scalar_prefetch = 0 : i64, scratch_operands = 0 : i64, tpu.core_type = #tpu.core_type<tc>, window_params = [{transform_indices = @transform_0, window_bounds = array<i64: 2, 32, 256>}, {pipeline_mode = #tpu.pipeline_mode<synchronous>, transform_indices = @transform_1, window_bounds = array<i64: 2, 32>}, {pipeline_mode = #tpu.pipeline_mode<synchronous>, transform_indices = @transform_2, window_bounds = array<i64: 2, 1>}, {pipeline_mode = #tpu.pipeline_mode<synchronous>, transform_indices = @transform_3, window_bounds = array<i64: 32, 2>}, {pipeline_mode = #tpu.pipeline_mode<synchronous>, transform_indices = @transform_4, window_bounds = array<i64: 32, 1>}, {pipeline_mode = #tpu.pipeline_mode<synchronous>, transform_indices = @transform_5, window_bounds = array<i64: 1, 32>}, {pipeline_mode = #tpu.pipeline_mode<synchronous>, transform_indices = @transform_6, window_bounds = array<i64: 1, 1>}, {transform_indices = @transform_7, window_bounds = array<i64: 2, 32, 256>}]} {
    %c0 = arith.constant 0 : index
    %c0_0 = arith.constant 0 : index
    %c0_1 = arith.constant 0 : index
    %0 = vector.load %arg1[%c0, %c0_0, %c0_1] : memref<2x32x256xf32, #tpu.memory_space<vmem>>, vector<2x32x256xf32>
    %cst = arith.constant dense<0.000000e+00> : vector<2x32xf32>
    %1 = vector.multi_reduction <add>, %0, %cst [2] : vector<2x32x256xf32> to vector<2x32xf32>
    %2 = vector.shape_cast %1 : vector<2x32xf32> to vector<2x32x1xf32>
    %cst_2 = arith.constant 2.560000e+02 : f32
    %3 = vector.broadcast %cst_2 : f32 to vector<2x32x1xf32>
    %4 = arith.divf %2, %3 : vector<2x32x1xf32>
    %c0_3 = arith.constant 0 : index
    %c0_4 = arith.constant 0 : index
    %5 = vector.load %arg2[%c0_3, %c0_4] : memref<2x32xf32, #tpu.memory_space<vmem>>, vector<2x32xf32>
    %6 = vector.shape_cast %5 : vector<2x32xf32> to vector<1x2x32xf32>
    %7 = vector.broadcast %6 : vector<1x2x32xf32> to vector<2x2x32xf32>
    %c0_5 = arith.constant 0 : index
    %c0_6 = arith.constant 0 : index
    %8 = vector.load %arg4[%c0_5, %c0_6] : memref<32x2xf32, #tpu.memory_space<vmem>>, vector<32x2xf32>
    %9 = vector.shape_cast %8 : vector<32x2xf32> to vector<1x32x2xf32>
    %10 = vector.broadcast %9 : vector<1x32x2xf32> to vector<2x32x2xf32>
    "tpu.trace_start"() <{level = 10 : i32, message = "brc,bcx->brx"}> : () -> ()
    %cst_7 = arith.constant dense<0.000000e+00> : vector<2x2x1xf32>
    %11 = tpu.matmul %7, %4, %cst_7 {dimension_numbers = #tpu.dot_dimension_numbers<[2], [1], [1], [2], [0, 0, 0, 1, 1, 2], [0], [0]>} : vector<2x2x32xf32>, vector<2x32x1xf32>, vector<2x2x1xf32> -> vector<2x2x1xf32>
    "tpu.trace_stop"() : () -> ()
    %c0_8 = arith.constant 0 : index
    %c0_9 = arith.constant 0 : index
    %12 = vector.load %arg3[%c0_8, %c0_9] : memref<2x1xf32, #tpu.memory_space<vmem>>, vector<2x1xf32>
    %13 = vector.shape_cast %12 : vector<2x1xf32> to vector<1x2x1xf32>
    %14 = vector.broadcast %13 : vector<1x2x1xf32> to vector<2x2x1xf32>
    %15 = arith.addf %11, %14 : vector<2x2x1xf32>
    %cst_10 = arith.constant 0.000000e+00 : f32
    %16 = vector.broadcast %cst_10 : f32 to vector<2x2x1xf32>
    %17 = arith.maximumf %15, %16 : vector<2x2x1xf32>
    "tpu.trace_start"() <{level = 10 : i32, message = "bcr,brx->bcx"}> : () -> ()
    %cst_11 = arith.constant dense<0.000000e+00> : vector<2x32x1xf32>
    %18 = tpu.matmul %10, %17, %cst_11 {dimension_numbers = #tpu.dot_dimension_numbers<[2], [1], [1], [2], [0, 0, 0, 1, 1, 2], [0], [0]>} : vector<2x32x2xf32>, vector<2x2x1xf32>, vector<2x32x1xf32> -> vector<2x32x1xf32>
    "tpu.trace_stop"() : () -> ()
    %c0_12 = arith.constant 0 : index
    %c0_13 = arith.constant 0 : index
    %19 = vector.load %arg5[%c0_12, %c0_13] : memref<32x1xf32, #tpu.memory_space<vmem>>, vector<32x1xf32>
    %20 = vector.shape_cast %19 : vector<32x1xf32> to vector<1x32x1xf32>
    %21 = vector.broadcast %20 : vector<1x32x1xf32> to vector<2x32x1xf32>
    %22 = arith.addf %18, %21 : vector<2x32x1xf32>
    %23 = arith.negf %22 : vector<2x32x1xf32>
    %24 = math.exp %23 : vector<2x32x1xf32>
    %cst_14 = arith.constant 1.000000e+00 : f32
    %25 = vector.broadcast %cst_14 : f32 to vector<2x32x1xf32>
    %26 = arith.addf %25, %24 : vector<2x32x1xf32>
    %27 = arith.divf %25, %26 : vector<2x32x1xf32>
    %c0_15 = arith.constant 0 : index
    %c0_16 = arith.constant 0 : index
    %28 = vector.load %arg6[%c0_15, %c0_16] : memref<1x32xf32, #tpu.memory_space<vmem>>, vector<1x32xf32>
    %29 = vector.shape_cast %28 : vector<1x32xf32> to vector<1x1x32xf32>
    %30 = vector.broadcast %29 : vector<1x1x32xf32> to vector<2x1x32xf32>
    "tpu.trace_start"() <{level = 10 : i32, message = "boc,bch->boh"}> : () -> ()
    %cst_17 = arith.constant dense<0.000000e+00> : vector<2x1x256xf32>
    %31 = tpu.matmul %30, %0, %cst_17 {dimension_numbers = #tpu.dot_dimension_numbers<[2], [1], [1], [2], [0, 0, 0, 1, 1, 2], [0], [0]>} : vector<2x1x32xf32>, vector<2x32x256xf32>, vector<2x1x256xf32> -> vector<2x1x256xf32>
    "tpu.trace_stop"() : () -> ()
    %c0_18 = arith.constant 0 : index
    %c0_19 = arith.constant 0 : index
    %32 = vector.load %arg7[%c0_18, %c0_19] : memref<1x1xf32, #tpu.memory_space<vmem>>, vector<1x1xf32>
    %33 = vector.shape_cast %32 : vector<1x1xf32> to vector<1x1x1xf32>
    %34 = vector.broadcast %33 : vector<1x1x1xf32> to vector<2x1x256xf32>
    %35 = arith.addf %31, %34 : vector<2x1x256xf32>
    %36 = arith.negf %35 : vector<2x1x256xf32>
    %37 = math.exp %36 : vector<2x1x256xf32>
    %cst_20 = arith.constant 1.000000e+00 : f32
    %38 = vector.broadcast %cst_20 : f32 to vector<2x1x256xf32>
    %39 = arith.addf %38, %37 : vector<2x1x256xf32>
    %40 = arith.divf %38, %39 : vector<2x1x256xf32>
    %41 = vector.broadcast %27 : vector<2x32x1xf32> to vector<2x32x256xf32>
    %42 = vector.broadcast %40 : vector<2x1x256xf32> to vector<2x32x256xf32>
    %43 = arith.addf %41, %42 : vector<2x32x256xf32>
    %44 = arith.mulf %0, %43 : vector<2x32x256xf32>
    %c0_21 = arith.constant 0 : index
    %c0_22 = arith.constant 0 : index
    %c0_23 = arith.constant 0 : index
    %45 = vector.load %arg8[%c0_21, %c0_22, %c0_23] : memref<2x32x256xf32, #tpu.memory_space<vmem>>, vector<2x32x256xf32>
    tpu.vector_store %arg8[%c0_21, %c0_22, %c0_23], %44 {strides = array<i32>} : memref<2x32x256xf32, #tpu.memory_space<vmem>>, vector<2x32x256xf32>,
    return
  }
  func.func @transform_0(%arg0: i32) -> (i32, i32, i32) {
    %c0_i32 = arith.constant 0 : i32
    %c0_i32_0 = arith.constant 0 : i32
    %c0_i32_1 = arith.constant 0 : i32
    return %arg0, %c0_i32, %c0_i32_0 : i32, i32, i32
  }
  func.func @transform_1(%arg0: i32) -> (i32, i32) {
    %c0_i32 = arith.constant 0 : i32
    %c0_i32_0 = arith.constant 0 : i32
    %c0_i32_1 = arith.constant 0 : i32
    return %c0_i32, %c0_i32_0 : i32, i32
  }
  func.func @transform_2(%arg0: i32) -> (i32, i32) {
    %c0_i32 = arith.constant 0 : i32
    %c0_i32_0 = arith.constant 0 : i32
    %c0_i32_1 = arith.constant 0 : i32
    return %c0_i32, %c0_i32_0 : i32, i32
  }
  func.func @transform_3(%arg0: i32) -> (i32, i32) {
    %c0_i32 = arith.constant 0 : i32
    %c0_i32_0 = arith.constant 0 : i32
    %c0_i32_1 = arith.constant 0 : i32
    return %c0_i32, %c0_i32_0 : i32, i32
  }
  func.func @transform_4(%arg0: i32) -> (i32, i32) {
    %c0_i32 = arith.constant 0 : i32
    %c0_i32_0 = arith.constant 0 : i32
    %c0_i32_1 = arith.constant 0 : i32
    return %c0_i32, %c0_i32_0 : i32, i32
  }
  func.func @transform_5(%arg0: i32) -> (i32, i32) {
    %c0_i32 = arith.constant 0 : i32
    %c0_i32_0 = arith.constant 0 : i32
    %c0_i32_1 = arith.constant 0 : i32
    return %c0_i32, %c0_i32_0 : i32, i32
  }
  func.func @transform_6(%arg0: i32) -> (i32, i32) {
    %c0_i32 = arith.constant 0 : i32
    %c0_i32_0 = arith.constant 0 : i32
    %c0_i32_1 = arith.constant 0 : i32
    return %c0_i32, %c0_i32_0 : i32, i32
  }
  func.func @transform_7(%arg0: i32) -> (i32, i32, i32) {
    %c0_i32 = arith.constant 0 : i32
    %c0_i32_0 = arith.constant 0 : i32
    %c0_i32_1 = arith.constant 0 : i32
    return %arg0, %c0_i32, %c0_i32_0 : i32, i32, i32
  }
}

</mosaic_0001>

<llo_original>
// kernel: tpu_custom_call.1
$region0: #{tpu_custom_call.1}
  #allocation0 [shape = 'u32[]', space=smem, size = 0x4, offset = 0x4, fixed_abs, tag = 'smem constant byte address 0x4 - core index']
  #allocation1 [shape = 'u32[144,128]{1,0:T(1,128)}', space=vmem, size = 0x12000, scoped, tag = 'internal scratch']
  #allocation2 [shape = 'f32[1,1]{1,0:T(1,128)S(1)}', space=vmem, size = 0x200, scoped, tag = 'scoped memory for tpu_custom_call.1']
  %s0 = inlined_call_operand.hbm [shape: f32[2,32,256], index: 0, kind: input, shape index: {}]
  %s1 = inlined_call_operand.vmem [shape: f32[2,32], index: 1, kind: input, shape index: {}]
  %s2 = inlined_call_operand.vmem [shape: f32[2,1], index: 2, kind: input, shape index: {}]
  %s3 = inlined_call_operand.vmem [shape: f32[32,2], index: 3, kind: input, shape index: {}]
  %s4 = inlined_call_operand.vmem [shape: f32[32,1], index: 4, kind: input, shape index: {}]
  %s5 = inlined_call_operand.vmem [shape: f32[1,32], index: 5, kind: input, shape index: {}]
  %s6 = inlined_call_operand.<no memory space> [shape: f32[1,1], index: 6, kind: input, shape index: {}]
  %s7 = inlined_call_operand.hbm [shape: f32[2,32,256], index: 7, kind: output, shape index: {}]
  %s8 = sld [smem:[#allocation0]]
  $region42: #{tpu_custom_call.1} parent=0
    _
  %s10 = ssub.s32 1, %s8
  %s11 = scalar_select 0, %s10, %s8
  %v12 = vstv %s6
  %13 = vst [vmem:[#allocation2] sm:$0x1] %v12
  $region1: #{tpu_custom_call.1} parent=0
    #allocation3 [shape = 'u8[65536]{0}', space=vmem, size = 0x10000, scoped, tag = 'input window, operand 0, single buffered']
    #allocation4 [shape = 's32[1]{0}', space=sflag, size = 0x4, scoped, tag = 'scoped memory for tpu_custom_call.1']
    #allocation5 [shape = 's32[1]{0}', space=sflag, size = 0x4, scoped, tag = 'scoped memory for tpu_custom_call.1']
    #allocation6 [shape = 'u8[65536]{0}', space=vmem, size = 0x10000, scoped, tag = 'output window, operand 0, single buffered']
    %14 = vsyncpa [#allocation4], 0
    %15 = vsyncpa [#allocation5], 0
    // Predicated region
    $region2: #{tpu_custom_call.1} parent=1 // pred_check
      _
    $region3: #{tpu_custom_call.1} parent=1 // pred_check_branch
      %17 = sbr.rel (0) target = $region5
    $region4: #{tpu_custom_call.1} parent=1 // pred_region
      %s19 = ssub.s32 2048, 2048
      %20 = vsyncadd [#allocation4], %s19
      %s21 = sshll.u32 [#allocation3], 4
      %s22 = int_to_ptr.vmem [resolvable:$true] %s21
      %27 = dma.hbm_to_vmem [thread:$0]  %s0, 2048, %s22, [#allocation4], 256, 256, 16
    $region5: #{tpu_custom_call.1} parent=1 // pred_fallthru
      _
    // Predicated region
    $region6: #{tpu_custom_call.1} parent=1 // pred_check
      _
    $region7: #{tpu_custom_call.1} parent=1 // pred_check_branch
      %29 = sbr.rel (0) target = $region9
    $region8: #{tpu_custom_call.1} parent=1 // pred_region
      _
    $region9: #{tpu_custom_call.1} parent=1 // pred_fallthru
      _
    // Predicated region
    $region10: #{tpu_custom_call.1} parent=1 // pred_check
      _
    $region11: #{tpu_custom_call.1} parent=1 // pred_check_branch
      %31 = sbr.rel (0) target = $region13
    $region12: #{tpu_custom_call.1} parent=1 // pred_region
      _
    $region13: #{tpu_custom_call.1} parent=1 // pred_fallthru
      _
    // Predicated region
    $region14: #{tpu_custom_call.1} parent=1 // pred_check
      _
    $region15: #{tpu_custom_call.1} parent=1 // pred_check_branch
      %33 = sbr.rel (0) target = $region17
    $region16: #{tpu_custom_call.1} parent=1 // pred_region
      _
    $region17: #{tpu_custom_call.1} parent=1 // pred_fallthru
      _
    // Predicated region
    $region18: #{tpu_custom_call.1} parent=1 // pred_check
      _
    $region19: #{tpu_custom_call.1} parent=1 // pred_check_branch
      %35 = sbr.rel (0) target = $region21
    $region20: #{tpu_custom_call.1} parent=1 // pred_region
      _
    $region21: #{tpu_custom_call.1} parent=1 // pred_fallthru
      _
    // Predicated region
    $region22: #{tpu_custom_call.1} parent=1 // pred_check
      _
    $region23: #{tpu_custom_call.1} parent=1 // pred_check_branch
      %37 = sbr.rel (0) target = $region25
    $region24: #{tpu_custom_call.1} parent=1 // pred_region
      _
    $region25: #{tpu_custom_call.1} parent=1 // pred_fallthru
      _
    // Predicated region
    $region26: #{tpu_custom_call.1} parent=1 // pred_check
      _
    $region27: #{tpu_custom_call.1} parent=1 // pred_check_branch
      %39 = sbr.rel (0) target = $region29
    $region28: #{tpu_custom_call.1} parent=1 // pred_region
      _
    $region29: #{tpu_custom_call.1} parent=1 // pred_fallthru
      _
    // Predicated region
    $region30: #{tpu_custom_call.1} parent=1 // pred_check
      _
    $region31: #{tpu_custom_call.1} parent=1 // pred_check_branch
      %41 = sbr.rel (0) target = $region33
    $region32: #{tpu_custom_call.1} parent=1 // pred_region
      %42 = dma.done [#allocation4], 2048
    $region33: #{tpu_custom_call.1} parent=1 // pred_fallthru
      _
    %v43 = vld [vmem:[#allocation3] sm:$0xff]
    %v44 = vld [vmem:[#allocation3 + $0x8] sm:$0xff]
    %v45 = vld [vmem:[#allocation3 + $0x10] sm:$0xff]
    %v46 = vld [vmem:[#allocation3 + $0x18] sm:$0xff]
    %v47 = vld [vmem:[#allocation3 + $0x20] sm:$0xff]
    %v48 = vld [vmem:[#allocation3 + $0x28] sm:$0xff]
    %v49 = vld [vmem:[#allocation3 + $0x30] sm:$0xff]
    %v50 = vld [vmem:[#allocation3 + $0x38] sm:$0xff]
    %v51 = vld [vmem:[#allocation3 + $0x40] sm:$0xff]
    %v52 = vld [vmem:[#allocation3 + $0x48] sm:$0xff]
    %v53 = vld [vmem:[#allocation3 + $0x50] sm:$0xff]
    %v54 = vld [vmem:[#allocation3 + $0x58] sm:$0xff]
    %v55 = vld [vmem:[#allocation3 + $0x60] sm:$0xff]
    %v56 = vld [vmem:[#allocation3 + $0x68] sm:$0xff]
    %v57 = vld [vmem:[#allocation3 + $0x70] sm:$0xff]
    %v58 = vld [vmem:[#allocation3 + $0x78] sm:$0xff]
    %v59 = vadd.f32 %v43, %v44
    %60 = vadd.xlane.f32.xlu0 %v59
    %v61 = vpop.xlane.xlu0 %60
    %v62 = vadd.f32 %v45, %v46
    %63 = vadd.xlane.f32.xlu0 %v62
    %v64 = vpop.xlane.xlu0 %63
    %v65 = vadd.f32 %v47, %v48
    %66 = vadd.xlane.f32.xlu0 %v65
    %v67 = vpop.xlane.xlu0 %66
    %v68 = vadd.f32 %v49, %v50
    %69 = vadd.xlane.f32.xlu0 %v68
    %v70 = vpop.xlane.xlu0 %69
    %v71 = vadd.f32 %v51, %v52
    %72 = vadd.xlane.f32.xlu0 %v71
    %v73 = vpop.xlane.xlu0 %72
    %v74 = vadd.f32 %v53, %v54
    %75 = vadd.xlane.f32.xlu0 %v74
    %v76 = vpop.xlane.xlu0 %75
    %v77 = vadd.f32 %v55, %v56
    %78 = vadd.xlane.f32.xlu0 %v77
    %v79 = vpop.xlane.xlu0 %78
    %v80 = vadd.f32 %v57, %v58
    %81 = vadd.xlane.f32.xlu0 %v80
    %v82 = vpop.xlane.xlu0 %81
    %v83 = vrcp.pop 256.0
    %v84 = vmul.f32 %v61, %v83
    %v85 = vmul.f32 %v64, %v83
    %v86 = vmul.f32 %v67, %v83
    %v87 = vmul.f32 %v70, %v83
    %v88 = vmul.f32 %v73, %v83
    %v89 = vmul.f32 %v76, %v83
    %v90 = vmul.f32 %v79, %v83
    %v91 = vmul.f32 %v82, %v83
    %v92 = vld [vmem:[%s1] sm:$0x3]
    %v93 = vld [vmem:[%s3] sm:$0xff]
    %v94 = vld [vmem:[%s3 + $0x8] sm:$0xff]
    %v95 = vld [vmem:[%s3 + $0x10] sm:$0xff]
    %v96 = vld [vmem:[%s3 + $0x18] sm:$0xff]
    %v97 = vld [vmem:[%s2] sm:$0x3]
    %vm98 = vcmask 261120
    %v100 = vsel %vm98, %v92, 0
    %102 = vmatprep.subr.mxu0 0.0
    %103 = vmatpush1.msra.mxu0 %v84
    %104 = vmatprep.subr.mxu0 0.0
    %105 = vmatpush1.msra.mxu0 %v85
    %106 = vmatprep.subr.mxu0 0.0
    %107 = vmatpush1.msra.mxu0 %v86
    %108 = vmatprep.subr.mxu0 0.0
    %109 = vmatpush1.msra.mxu0 %v87
    %110 = vmatprep.subr.mxu0 0.0
    %111 = vmatpush1.msra.mxu0 0.0
    %112 = vmatprep.subr.mxu0 0.0
    %113 = vmatpush1.msra.mxu0 0.0
    %114 = vmatprep.subr.mxu0 0.0
    %115 = vmatpush1.msra.mxu0 0.0
    %116 = vmatprep.subr.mxu0 0.0
    %117 = vmatpush1.msra.mxu0 0.0
    %118 = vmatprep.subr.mxu0 0.0
    %119 = vmatpush1.msra.mxu0 0.0
    %120 = vmatprep.subr.mxu0 0.0
    %121 = vmatpush1.msra.mxu0 0.0
    %122 = vmatprep.subr.mxu0 0.0
    %123 = vmatpush1.msra.mxu0 0.0
    %124 = vmatprep.subr.mxu0 0.0
    %125 = vmatpush1.msra.mxu0 0.0
    %126 = vmatprep.subr.mxu0 0.0
    %127 = vmatpush1.msra.mxu0 0.0
    %128 = vmatprep.subr.mxu0 0.0
    %129 = vmatpush1.msra.mxu0 0.0
    %130 = vmatprep.subr.mxu0 0.0
    %131 = vmatpush1.msra.mxu0 0.0
    %132 = vmatprep.subr.mxu0 0.0
    %133 = vmatpush1.msra.mxu0 0.0
    %134 = vmatprep.subr.mxu0 0.0
    %135 = vmatpush1.msra.mxu0 0.0
    %136 = vmatprep.subr.mxu0 0.0
    %137 = vmatpush1.msra.mxu0 0.0
    %138 = vmatprep.subr.mxu0 0.0
    %139 = vmatpush1.msra.mxu0 0.0
    %140 = vmatprep.subr.mxu0 0.0
    %141 = vmatpush1.msra.mxu0 0.0
    %142 = vmatprep.subr.mxu0 0.0
    %143 = vmatpush1.msra.mxu0 0.0
    %144 = vmatprep.subr.mxu0 0.0
    %145 = vmatpush1.msra.mxu0 0.0
    %146 = vmatprep.subr.mxu0 0.0
    %147 = vmatpush1.msra.mxu0 0.0
    %148 = vmatprep.subr.mxu0 0.0
    %149 = vmatpush1.msra.mxu0 0.0
    %150 = vmatprep.subr.mxu0 0.0
    %151 = vmatpush1.msra.mxu0 0.0
    %152 = vmatprep.subr.mxu0 0.0
    %153 = vmatpush1.msra.mxu0 0.0
    %154 = vmatprep.subr.mxu0 0.0
    %155 = vmatpush1.msra.mxu0 0.0
    %156 = vmatprep.subr.mxu0 0.0
    %157 = vmatpush1.msra.mxu0 0.0
    %158 = vmatprep.subr.mxu0 0.0
    %159 = vmatpush1.msra.mxu0 0.0
    %160 = vmatprep.subr.mxu0 0.0
    %161 = vmatpush1.msra.mxu0 0.0
    %162 = vmatprep.subr.mxu0 0.0
    %163 = vmatpush1.msra.mxu0 0.0
    %164 = vmatprep.subr.mxu0 0.0
    %165 = vmatpush1.msra.mxu0 0.0
    %166 = vmatprep.mubr.f32.mxu0 0.0
    %167 = vmatmul.mubr.f32.gmra.mrb[0].mxu0 %v100
    %v168 = vpop.f32.mrb[0].mxu0
    %v169 = vadd.f32 %v97, %v168
    %v170 = vpop.f32.mrb[0].mxu0
    %171 = vdwg.mxu0
    %172 = vmatprep.subr.mxu0 0.0
    %173 = vmatpush1.msra.mxu0 %v88
    %174 = vmatprep.subr.mxu0 0.0
    %175 = vmatpush1.msra.mxu0 %v89
    %176 = vmatprep.subr.mxu0 0.0
    %177 = vmatpush1.msra.mxu0 %v90
    %178 = vmatprep.subr.mxu0 0.0
    %179 = vmatpush1.msra.mxu0 %v91
    %180 = vmatprep.subr.mxu0 0.0
    %181 = vmatpush1.msra.mxu0 0.0
    %182 = vmatprep.subr.mxu0 0.0
    %183 = vmatpush1.msra.mxu0 0.0
    %184 = vmatprep.subr.mxu0 0.0
    %185 = vmatpush1.msra.mxu0 0.0
    %186 = vmatprep.subr.mxu0 0.0
    %187 = vmatpush1.msra.mxu0 0.0
    %188 = vmatprep.subr.mxu0 0.0
    %189 = vmatpush1.msra.mxu0 0.0
    %190 = vmatprep.subr.mxu0 0.0
    %191 = vmatpush1.msra.mxu0 0.0
    %192 = vmatprep.subr.mxu0 0.0
    %193 = vmatpush1.msra.mxu0 0.0
    %194 = vmatprep.subr.mxu0 0.0
    %195 = vmatpush1.msra.mxu0 0.0
    %196 = vmatprep.subr.mxu0 0.0
    %197 = vmatpush1.msra.mxu0 0.0
    %198 = vmatprep.subr.mxu0 0.0
    %199 = vmatpush1.msra.mxu0 0.0
    %200 = vmatprep.subr.mxu0 0.0
    %201 = vmatpush1.msra.mxu0 0.0
    %202 = vmatprep.subr.mxu0 0.0
    %203 = vmatpush1.msra.mxu0 0.0
    %204 = vmatprep.subr.mxu0 0.0
    %205 = vmatpush1.msra.mxu0 0.0
    %206 = vmatprep.subr.mxu0 0.0
    %207 = vmatpush1.msra.mxu0 0.0
    %208 = vmatprep.subr.mxu0 0.0
    %209 = vmatpush1.msra.mxu0 0.0
    %210 = vmatprep.subr.mxu0 0.0
    %211 = vmatpush1.msra.mxu0 0.0
    %212 = vmatprep.subr.mxu0 0.0
    %213 = vmatpush1.msra.mxu0 0.0
    %214 = vmatprep.subr.mxu0 0.0
    %215 = vmatpush1.msra.mxu0 0.0
    %216 = vmatprep.subr.mxu0 0.0
    %217 = vmatpush1.msra.mxu0 0.0
    %218 = vmatprep.subr.mxu0 0.0
    %219 = vmatpush1.msra.mxu0 0.0
    %220 = vmatprep.subr.mxu0 0.0
    %221 = vmatpush1.msra.mxu0 0.0
    %222 = vmatprep.subr.mxu0 0.0
    %223 = vmatpush1.msra.mxu0 0.0
    %224 = vmatprep.subr.mxu0 0.0
    %225 = vmatpush1.msra.mxu0 0.0
    %226 = vmatprep.subr.mxu0 0.0
    %227 = vmatpush1.msra.mxu0 0.0
    %228 = vmatprep.subr.mxu0 0.0
    %229 = vmatpush1.msra.mxu0 0.0
    %230 = vmatprep.subr.mxu0 0.0
    %231 = vmatpush1.msra.mxu0 0.0
    %232 = vmatprep.subr.mxu0 0.0
    %233 = vmatpush1.msra.mxu0 0.0
    %234 = vmatprep.subr.mxu0 0.0
    %235 = vmatpush1.msra.mxu0 0.0
    %236 = vmatprep.mubr.f32.mxu0 0.0
    %237 = vmatmul.mubr.f32.gmra.mrb[0].mxu0 %v100
    %v238 = vpop.f32.mrb[0].mxu0
    %v239 = vadd.f32 %v97, %v238
    %v240 = vpop.f32.mrb[0].mxu0
    %241 = vdwg.mxu0
    %v242 = vmax.f32 %v169, 0.0
    %v243 = vmax.f32 %v239, 0.0
    %v244 = vld [vmem:[%s4] sm:$0xff]
    %v245 = vld [vmem:[%s4 + $0x8] sm:$0xff]
    %v246 = vld [vmem:[%s4 + $0x10] sm:$0xff]
    %v247 = vld [vmem:[%s4 + $0x18] sm:$0xff]
    %vm248 = vcmask 15360
    %v250 = vsel %vm248, %v93, 0
    %v253 = vsel %vm248, %v94, 0
    %v256 = vsel %vm248, %v95, 0
    %v259 = vsel %vm248, %v96, 0
    %vm261 = vcmask 1041408
    %v263 = vsel %vm261, %v242, 0
    %265 = vmatprep.subr.mxu0 0.0
    %266 = vmatpush1.msra.mxu0 %v263
    %267 = vmatprep.subr.mxu0 0.0
    %268 = vmatpush1.msra.mxu0 0.0
    %269 = vmatprep.subr.mxu0 0.0
    %270 = vmatpush1.msra.mxu0 0.0
    %271 = vmatprep.subr.mxu0 0.0
    %272 = vmatpush1.msra.mxu0 0.0
    %273 = vmatprep.subr.mxu0 0.0
    %274 = vmatpush1.msra.mxu0 0.0
    %275 = vmatprep.subr.mxu0 0.0
    %276 = vmatpush1.msra.mxu0 0.0
    %277 = vmatprep.subr.mxu0 0.0
    %278 = vmatpush1.msra.mxu0 0.0
    %279 = vmatprep.subr.mxu0 0.0
    %280 = vmatpush1.msra.mxu0 0.0
    %281 = vmatprep.subr.mxu0 0.0
    %282 = vmatpush1.msra.mxu0 0.0
    %283 = vmatprep.subr.mxu0 0.0
    %284 = vmatpush1.msra.mxu0 0.0
    %285 = vmatprep.subr.mxu0 0.0
    %286 = vmatpush1.msra.mxu0 0.0
    %287 = vmatprep.subr.mxu0 0.0
    %288 = vmatpush1.msra.mxu0 0.0
    %289 = vmatprep.subr.mxu0 0.0
    %290 = vmatpush1.msra.mxu0 0.0
    %291 = vmatprep.subr.mxu0 0.0
    %292 = vmatpush1.msra.mxu0 0.0
    %293 = vmatprep.subr.mxu0 0.0
    %294 = vmatpush1.msra.mxu0 0.0
    %295 = vmatprep.subr.mxu0 0.0
    %296 = vmatpush1.msra.mxu0 0.0
    %297 = vmatprep.subr.mxu0 0.0
    %298 = vmatpush1.msra.mxu0 0.0
    %299 = vmatprep.subr.mxu0 0.0
    %300 = vmatpush1.msra.mxu0 0.0
    %301 = vmatprep.subr.mxu0 0.0
    %302 = vmatpush1.msra.mxu0 0.0
    %303 = vmatprep.subr.mxu0 0.0
    %304 = vmatpush1.msra.mxu0 0.0
    %305 = vmatprep.subr.mxu0 0.0
    %306 = vmatpush1.msra.mxu0 0.0
    %307 = vmatprep.subr.mxu0 0.0
    %308 = vmatpush1.msra.mxu0 0.0
    %309 = vmatprep.subr.mxu0 0.0
    %310 = vmatpush1.msra.mxu0 0.0
    %311 = vmatprep.subr.mxu0 0.0
    %312 = vmatpush1.msra.mxu0 0.0
    %313 = vmatprep.subr.mxu0 0.0
    %314 = vmatpush1.msra.mxu0 0.0
    %315 = vmatprep.subr.mxu0 0.0
    %316 = vmatpush1.msra.mxu0 0.0
    %317 = vmatprep.subr.mxu0 0.0
    %318 = vmatpush1.msra.mxu0 0.0
    %319 = vmatprep.subr.mxu0 0.0
    %320 = vmatpush1.msra.mxu0 0.0
    %321 = vmatprep.subr.mxu0 0.0
    %322 = vmatpush1.msra.mxu0 0.0
    %323 = vmatprep.subr.mxu0 0.0
    %324 = vmatpush1.msra.mxu0 0.0
    %325 = vmatprep.subr.mxu0 0.0
    %326 = vmatpush1.msra.mxu0 0.0
    %327 = vmatprep.subr.mxu0 0.0
    %328 = vmatpush1.msra.mxu0 0.0
    %329 = vmatprep.mubr.f32.mxu0 0.0
    %330 = vmatmul.mubr.f32.gmra.mrb[0].mxu0 %v250
    %v331 = vpop.f32.mrb[0].mxu0
    %v332 = vadd.f32 %v244, %v331
    %v333 = vpop.f32.mrb[0].mxu0
    %334 = vmatprep.mubr.f32.mxu0 0.0
    %335 = vmatmul.mubr.f32.gmra.mrb[0].mxu0 %v253
    %v336 = vpop.f32.mrb[0].mxu0
    %v337 = vadd.f32 %v245, %v336
    %v338 = vpop.f32.mrb[0].mxu0
    %339 = vmatprep.mubr.f32.mxu0 0.0
    %340 = vmatmul.mubr.f32.gmra.mrb[0].mxu0 %v256
    %v341 = vpop.f32.mrb[0].mxu0
    %v342 = vadd.f32 %v246, %v341
    %v343 = vpop.f32.mrb[0].mxu0
    %344 = vmatprep.mubr.f32.mxu0 0.0
    %345 = vmatmul.mubr.f32.gmra.mrb[0].mxu0 %v259
    %v346 = vpop.f32.mrb[0].mxu0
    %v347 = vadd.f32 %v247, %v346
    %v348 = vpop.f32.mrb[0].mxu0
    %349 = vdwg.mxu0
    %v351 = vsel %vm261, %v243, 0
    %353 = vmatprep.subr.mxu0 0.0
    %354 = vmatpush1.msra.mxu0 %v351
    %355 = vmatprep.subr.mxu0 0.0
    %356 = vmatpush1.msra.mxu0 0.0
    %357 = vmatprep.subr.mxu0 0.0
    %358 = vmatpush1.msra.mxu0 0.0
    %359 = vmatprep.subr.mxu0 0.0
    %360 = vmatpush1.msra.mxu0 0.0
    %361 = vmatprep.subr.mxu0 0.0
    %362 = vmatpush1.msra.mxu0 0.0
    %363 = vmatprep.subr.mxu0 0.0
    %364 = vmatpush1.msra.mxu0 0.0
    %365 = vmatprep.subr.mxu0 0.0
    %366 = vmatpush1.msra.mxu0 0.0
    %367 = vmatprep.subr.mxu0 0.0
    %368 = vmatpush1.msra.mxu0 0.0
    %369 = vmatprep.subr.mxu0 0.0
    %370 = vmatpush1.msra.mxu0 0.0
    %371 = vmatprep.subr.mxu0 0.0
    %372 = vmatpush1.msra.mxu0 0.0
    %373 = vmatprep.subr.mxu0 0.0
    %374 = vmatpush1.msra.mxu0 0.0
    %375 = vmatprep.subr.mxu0 0.0
    %376 = vmatpush1.msra.mxu0 0.0
    %377 = vmatprep.subr.mxu0 0.0
    %378 = vmatpush1.msra.mxu0 0.0
    %379 = vmatprep.subr.mxu0 0.0
    %380 = vmatpush1.msra.mxu0 0.0
    %381 = vmatprep.subr.mxu0 0.0
    %382 = vmatpush1.msra.mxu0 0.0
    %383 = vmatprep.subr.mxu0 0.0
    %384 = vmatpush1.msra.mxu0 0.0
    %385 = vmatprep.subr.mxu0 0.0
    %386 = vmatpush1.msra.mxu0 0.0
    %387 = vmatprep.subr.mxu0 0.0
    %388 = vmatpush1.msra.mxu0 0.0
    %389 = vmatprep.subr.mxu0 0.0
    %390 = vmatpush1.msra.mxu0 0.0
    %391 = vmatprep.subr.mxu0 0.0
    %392 = vmatpush1.msra.mxu0 0.0
    %393 = vmatprep.subr.mxu0 0.0
    %394 = vmatpush1.msra.mxu0 0.0
    %395 = vmatprep.subr.mxu0 0.0
    %396 = vmatpush1.msra.mxu0 0.0
    %397 = vmatprep.subr.mxu0 0.0
    %398 = vmatpush1.msra.mxu0 0.0
    %399 = vmatprep.subr.mxu0 0.0
    %400 = vmatpush1.msra.mxu0 0.0
    %401 = vmatprep.subr.mxu0 0.0
    %402 = vmatpush1.msra.mxu0 0.0
    %403 = vmatprep.subr.mxu0 0.0
    %404 = vmatpush1.msra.mxu0 0.0
    %405 = vmatprep.subr.mxu0 0.0
    %406 = vmatpush1.msra.mxu0 0.0
    %407 = vmatprep.subr.mxu0 0.0
    %408 = vmatpush1.msra.mxu0 0.0
    %409 = vmatprep.subr.mxu0 0.0
    %410 = vmatpush1.msra.mxu0 0.0
    %411 = vmatprep.subr.mxu0 0.0
    %412 = vmatpush1.msra.mxu0 0.0
    %413 = vmatprep.subr.mxu0 0.0
    %414 = vmatpush1.msra.mxu0 0.0
    %415 = vmatprep.subr.mxu0 0.0
    %416 = vmatpush1.msra.mxu0 0.0
    %417 = vmatprep.mubr.f32.mxu0 0.0
    %418 = vmatmul.mubr.f32.gmra.mrb[0].mxu0 %v250
    %v419 = vpop.f32.mrb[0].mxu0
    %v420 = vadd.f32 %v244, %v419
    %v421 = vpop.f32.mrb[0].mxu0
    %422 = vmatprep.mubr.f32.mxu0 0.0
    %423 = vmatmul.mubr.f32.gmra.mrb[0].mxu0 %v253
    %v424 = vpop.f32.mrb[0].mxu0
    %v425 = vadd.f32 %v245, %v424
    %v426 = vpop.f32.mrb[0].mxu0
    %427 = vmatprep.mubr.f32.mxu0 0.0
    %428 = vmatmul.mubr.f32.gmra.mrb[0].mxu0 %v256
    %v429 = vpop.f32.mrb[0].mxu0
    %v430 = vadd.f32 %v246, %v429
    %v431 = vpop.f32.mrb[0].mxu0
    %432 = vmatprep.mubr.f32.mxu0 0.0
    %433 = vmatmul.mubr.f32.gmra.mrb[0].mxu0 %v259
    %v434 = vpop.f32.mrb[0].mxu0
    %v435 = vadd.f32 %v247, %v434
    %v436 = vpop.f32.mrb[0].mxu0
    %437 = vdwg.mxu0
    %v438 = vxor.u32 %v332, 2147483648
    %v439 = vxor.u32 %v337, 2147483648
    %v440 = vxor.u32 %v342, 2147483648
    %v441 = vxor.u32 %v347, 2147483648
    %v442 = vxor.u32 %v420, 2147483648
    %v443 = vxor.u32 %v425, 2147483648
    %v444 = vxor.u32 %v430, 2147483648
    %v445 = vxor.u32 %v435, 2147483648
    %v446 = vmul.f32 %v438, 1.442695
    %v447 = vpow.pop %v446
    %v448 = vmul.f32 %v439, 1.442695
    %v449 = vpow.pop %v448
    %v450 = vmul.f32 %v440, 1.442695
    %v451 = vpow.pop %v450
    %v452 = vmul.f32 %v441, 1.442695
    %v453 = vpow.pop %v452
    %v454 = vmul.f32 %v442, 1.442695
    %v455 = vpow.pop %v454
    %v456 = vmul.f32 %v443, 1.442695
    %v457 = vpow.pop %v456
    %v458 = vmul.f32 %v444, 1.442695
    %v459 = vpow.pop %v458
    %v460 = vmul.f32 %v445, 1.442695
    %v461 = vpow.pop %v460
    %v462 = vadd.f32 %v447, 1.0
    %v463 = vadd.f32 %v449, 1.0
    %v464 = vadd.f32 %v451, 1.0
    %v465 = vadd.f32 %v453, 1.0
    %v466 = vadd.f32 %v455, 1.0
    %v467 = vadd.f32 %v457, 1.0
    %v468 = vadd.f32 %v459, 1.0
    %v469 = vadd.f32 %v461, 1.0
    %v470 = vrcp.pop %v462
    %v471 = vmul.f32 1.0, %v470
    %v472 = vrcp.pop %v463
    %v473 = vmul.f32 1.0, %v472
    %v474 = vrcp.pop %v464
    %v475 = vmul.f32 1.0, %v474
    %v476 = vrcp.pop %v465
    %v477 = vmul.f32 1.0, %v476
    %v478 = vrcp.pop %v466
    %v479 = vmul.f32 1.0, %v478
    %v480 = vrcp.pop %v467
    %v481 = vmul.f32 1.0, %v480
    %v482 = vrcp.pop %v468
    %v483 = vmul.f32 1.0, %v482
    %v484 = vrcp.pop %v469
    %v485 = vmul.f32 1.0, %v484
    %v486 = vld [vmem:[%s5] sm:$0x1]
    %v487 = vld [vmem:[#allocation2] sm:$0x1]
    %489 = vset.pattern.permute.xlu0 0
    %490 = vperm.xlu0 %489, %v487
    %v491 = vpop.permute.xlu0 %490
    %v493 = vlaneseq
    %v494 = vshrl.u32 %v493, 7
    %v495 = vsub.s32 0, %v494
    %v496 = vrot.slane %v491, %v495
    %v498 = vsel %vm98, %v486, 0
    %500 = vmatprep.subr.mxu0 %v44
    %501 = vmatpush1.msra.mxu0 %v43
    %502 = vmatprep.subr.mxu0 %v46
    %503 = vmatpush1.msra.mxu0 %v45
    %504 = vmatprep.subr.mxu0 %v48
    %505 = vmatpush1.msra.mxu0 %v47
    %506 = vmatprep.subr.mxu0 %v50
    %507 = vmatpush1.msra.mxu0 %v49
    %508 = vmatprep.subr.mxu0 0.0
    %509 = vmatpush1.msra.mxu0 0.0
    %510 = vmatprep.subr.mxu0 0.0
    %511 = vmatpush1.msra.mxu0 0.0
    %512 = vmatprep.subr.mxu0 0.0
    %513 = vmatpush1.msra.mxu0 0.0
    %514 = vmatprep.subr.mxu0 0.0
    %515 = vmatpush1.msra.mxu0 0.0
    %516 = vmatprep.subr.mxu0 0.0
    %517 = vmatpush1.msra.mxu0 0.0
    %518 = vmatprep.subr.mxu0 0.0
    %519 = vmatpush1.msra.mxu0 0.0
    %520 = vmatprep.subr.mxu0 0.0
    %521 = vmatpush1.msra.mxu0 0.0
    %522 = vmatprep.subr.mxu0 0.0
    %523 = vmatpush1.msra.mxu0 0.0
    %524 = vmatprep.subr.mxu0 0.0
    %525 = vmatpush1.msra.mxu0 0.0
    %526 = vmatprep.subr.mxu0 0.0
    %527 = vmatpush1.msra.mxu0 0.0
    %528 = vmatprep.subr.mxu0 0.0
    %529 = vmatpush1.msra.mxu0 0.0
    %530 = vmatprep.subr.mxu0 0.0
    %531 = vmatpush1.msra.mxu0 0.0
    %532 = vmatprep.subr.mxu0 0.0
    %533 = vmatpush1.msra.mxu0 0.0
    %534 = vmatprep.subr.mxu0 0.0
    %535 = vmatpush1.msra.mxu0 0.0
    %536 = vmatprep.subr.mxu0 0.0
    %537 = vmatpush1.msra.mxu0 0.0
    %538 = vmatprep.subr.mxu0 0.0
    %539 = vmatpush1.msra.mxu0 0.0
    %540 = vmatprep.subr.mxu0 0.0
    %541 = vmatpush1.msra.mxu0 0.0
    %542 = vmatprep.subr.mxu0 0.0
    %543 = vmatpush1.msra.mxu0 0.0
    %544 = vmatprep.subr.mxu0 0.0
    %545 = vmatpush1.msra.mxu0 0.0
    %546 = vmatprep.subr.mxu0 0.0
    %547 = vmatpush1.msra.mxu0 0.0
    %548 = vmatprep.subr.mxu0 0.0
    %549 = vmatpush1.msra.mxu0 0.0
    %550 = vmatprep.subr.mxu0 0.0
    %551 = vmatpush1.msra.mxu0 0.0
    %552 = vmatprep.subr.mxu0 0.0
    %553 = vmatpush1.msra.mxu0 0.0
    %554 = vmatprep.subr.mxu0 0.0
    %555 = vmatpush1.msra.mxu0 0.0
    %556 = vmatprep.subr.mxu0 0.0
    %557 = vmatpush1.msra.mxu0 0.0
    %558 = vmatprep.subr.mxu0 0.0
    %559 = vmatpush1.msra.mxu0 0.0
    %560 = vmatprep.subr.mxu0 0.0
    %561 = vmatpush1.msra.mxu0 0.0
    %562 = vmatprep.subr.mxu0 0.0
    %563 = vmatpush1.msra.mxu0 0.0
    %564 = vmatprep.mubr.f32.mxu0 0.0
    %565 = vmatmul.mubr.f32.gmra.mrb[0].mxu0 %v498
    %v566 = vpop.f32.mrb[0].mxu0
    %v567 = vadd.f32 %v496, %v566
    %v568 = vpop.f32.mrb[0].mxu0
    %v569 = vadd.f32 %v496, %v568
    %570 = vdwg.mxu0
    %571 = vmatprep.subr.mxu0 %v52
    %572 = vmatpush1.msra.mxu0 %v51
    %573 = vmatprep.subr.mxu0 %v54
    %574 = vmatpush1.msra.mxu0 %v53
    %575 = vmatprep.subr.mxu0 %v56
    %576 = vmatpush1.msra.mxu0 %v55
    %577 = vmatprep.subr.mxu0 %v58
    %578 = vmatpush1.msra.mxu0 %v57
    %579 = vmatprep.subr.mxu0 0.0
    %580 = vmatpush1.msra.mxu0 0.0
    %581 = vmatprep.subr.mxu0 0.0
    %582 = vmatpush1.msra.mxu0 0.0
    %583 = vmatprep.subr.mxu0 0.0
    %584 = vmatpush1.msra.mxu0 0.0
    %585 = vmatprep.subr.mxu0 0.0
    %586 = vmatpush1.msra.mxu0 0.0
    %587 = vmatprep.subr.mxu0 0.0
    %588 = vmatpush1.msra.mxu0 0.0
    %589 = vmatprep.subr.mxu0 0.0
    %590 = vmatpush1.msra.mxu0 0.0
    %591 = vmatprep.subr.mxu0 0.0
    %592 = vmatpush1.msra.mxu0 0.0
    %593 = vmatprep.subr.mxu0 0.0
    %594 = vmatpush1.msra.mxu0 0.0
    %595 = vmatprep.subr.mxu0 0.0
    %596 = vmatpush1.msra.mxu0 0.0
    %597 = vmatprep.subr.mxu0 0.0
    %598 = vmatpush1.msra.mxu0 0.0
    %599 = vmatprep.subr.mxu0 0.0
    %600 = vmatpush1.msra.mxu0 0.0
    %601 = vmatprep.subr.mxu0 0.0
    %602 = vmatpush1.msra.mxu0 0.0
    %603 = vmatprep.subr.mxu0 0.0
    %604 = vmatpush1.msra.mxu0 0.0
    %605 = vmatprep.subr.mxu0 0.0
    %606 = vmatpush1.msra.mxu0 0.0
    %607 = vmatprep.subr.mxu0 0.0
    %608 = vmatpush1.msra.mxu0 0.0
    %609 = vmatprep.subr.mxu0 0.0
    %610 = vmatpush1.msra.mxu0 0.0
    %611 = vmatprep.subr.mxu0 0.0
    %612 = vmatpush1.msra.mxu0 0.0
    %613 = vmatprep.subr.mxu0 0.0
    %614 = vmatpush1.msra.mxu0 0.0
    %615 = vmatprep.subr.mxu0 0.0
    %616 = vmatpush1.msra.mxu0 0.0
    %617 = vmatprep.subr.mxu0 0.0
    %618 = vmatpush1.msra.mxu0 0.0
    %619 = vmatprep.subr.mxu0 0.0
    %620 = vmatpush1.msra.mxu0 0.0
    %621 = vmatprep.subr.mxu0 0.0
    %622 = vmatpush1.msra.mxu0 0.0
    %623 = vmatprep.subr.mxu0 0.0
    %624 = vmatpush1.msra.mxu0 0.0
    %625 = vmatprep.subr.mxu0 0.0
    %626 = vmatpush1.msra.mxu0 0.0
    %627 = vmatprep.subr.mxu0 0.0
    %628 = vmatpush1.msra.mxu0 0.0
    %629 = vmatprep.subr.mxu0 0.0
    %630 = vmatpush1.msra.mxu0 0.0
    %631 = vmatprep.subr.mxu0 0.0
    %632 = vmatpush1.msra.mxu0 0.0
    %633 = vmatprep.subr.mxu0 0.0
    %634 = vmatpush1.msra.mxu0 0.0
    %635 = vmatprep.mubr.f32.mxu0 0.0
    %636 = vmatmul.mubr.f32.gmra.mrb[0].mxu0 %v498
    %v637 = vpop.f32.mrb[0].mxu0
    %v638 = vadd.f32 %v496, %v637
    %v639 = vpop.f32.mrb[0].mxu0
    %v640 = vadd.f32 %v496, %v639
    %641 = vdwg.mxu0
    %v642 = vxor.u32 %v567, 2147483648
    %v643 = vxor.u32 %v569, 2147483648
    %v644 = vxor.u32 %v638, 2147483648
    %v645 = vxor.u32 %v640, 2147483648
    %v646 = vmul.f32 %v642, 1.442695
    %v647 = vpow.pop %v646
    %v648 = vmul.f32 %v643, 1.442695
    %v649 = vpow.pop %v648
    %v650 = vmul.f32 %v644, 1.442695
    %v651 = vpow.pop %v650
    %v652 = vmul.f32 %v645, 1.442695
    %v653 = vpow.pop %v652
    %v654 = vadd.f32 %v647, 1.0
    %v655 = vadd.f32 %v649, 1.0
    %v656 = vadd.f32 %v651, 1.0
    %v657 = vadd.f32 %v653, 1.0
    %v658 = vrcp.pop %v654
    %v659 = vmul.f32 1.0, %v658
    %v660 = vrcp.pop %v655
    %v661 = vmul.f32 1.0, %v660
    %v662 = vrcp.pop %v656
    %v663 = vmul.f32 1.0, %v662
    %v664 = vrcp.pop %v657
    %v665 = vmul.f32 1.0, %v664
    %667 = vset.pattern.permute.xlu0 0
    %668 = vperm.xlu0 %667, %v471
    %v669 = vpop.permute.xlu0 %668
    %672 = vset.pattern.permute.xlu0 0
    %673 = vperm.xlu0 %672, %v473
    %v674 = vpop.permute.xlu0 %673
    %677 = vset.pattern.permute.xlu0 0
    %678 = vperm.xlu0 %677, %v475
    %v679 = vpop.permute.xlu0 %678
    %682 = vset.pattern.permute.xlu0 0
    %683 = vperm.xlu0 %682, %v477
    %v684 = vpop.permute.xlu0 %683
    %687 = vset.pattern.permute.xlu0 0
    %688 = vperm.xlu0 %687, %v479
    %v689 = vpop.permute.xlu0 %688
    %692 = vset.pattern.permute.xlu0 0
    %693 = vperm.xlu0 %692, %v481
    %v694 = vpop.permute.xlu0 %693
    %697 = vset.pattern.permute.xlu0 0
    %698 = vperm.xlu0 %697, %v483
    %v699 = vpop.permute.xlu0 %698
    %702 = vset.pattern.permute.xlu0 0
    %703 = vperm.xlu0 %702, %v485
    %v704 = vpop.permute.xlu0 %703
    %v706 = vlaneseq
    %v707 = vshrl.u32 %v706, 7
    %v708 = vsub.s32 0, %v707
    %v709 = vrot.slane %v659, %v708
    %v710 = vlaneseq
    %v711 = vshrl.u32 %v710, 7
    %v712 = vsub.s32 0, %v711
    %v713 = vrot.slane %v661, %v712
    %v714 = vlaneseq
    %v715 = vshrl.u32 %v714, 7
    %v716 = vsub.s32 0, %v715
    %v717 = vrot.slane %v663, %v716
    %v718 = vlaneseq
    %v719 = vshrl.u32 %v718, 7
    %v720 = vsub.s32 0, %v719
    %v721 = vrot.slane %v665, %v720
    %v722 = vadd.f32 %v669, %v709
    %v723 = vadd.f32 %v669, %v713
    %v724 = vadd.f32 %v674, %v709
    %v725 = vadd.f32 %v674, %v713
    %v726 = vadd.f32 %v679, %v709
    %v727 = vadd.f32 %v679, %v713
    %v728 = vadd.f32 %v684, %v709
    %v729 = vadd.f32 %v684, %v713
    %v730 = vadd.f32 %v689, %v717
    %v731 = vadd.f32 %v689, %v721
    %v732 = vadd.f32 %v694, %v717
    %v733 = vadd.f32 %v694, %v721
    %v734 = vadd.f32 %v699, %v717
    %v735 = vadd.f32 %v699, %v721
    %v736 = vadd.f32 %v704, %v717
    %v737 = vadd.f32 %v704, %v721
    %v738 = vmul.f32 %v43, %v722
    %v739 = vmul.f32 %v44, %v723
    %v740 = vmul.f32 %v45, %v724
    %v741 = vmul.f32 %v46, %v725
    %v742 = vmul.f32 %v47, %v726
    %v743 = vmul.f32 %v48, %v727
    %v744 = vmul.f32 %v49, %v728
    %v745 = vmul.f32 %v50, %v729
    %v746 = vmul.f32 %v51, %v730
    %v747 = vmul.f32 %v52, %v731
    %v748 = vmul.f32 %v53, %v732
    %v749 = vmul.f32 %v54, %v733
    %v750 = vmul.f32 %v55, %v734
    %v751 = vmul.f32 %v56, %v735
    %v752 = vmul.f32 %v57, %v736
    %v753 = vmul.f32 %v58, %v737
    %754 = vst [vmem:[#allocation6] sm:$0xff] %v738
    %755 = vst [vmem:[#allocation6 + $0x8] sm:$0xff] %v739
    %756 = vst [vmem:[#allocation6 + $0x10] sm:$0xff] %v740
    %757 = vst [vmem:[#allocation6 + $0x18] sm:$0xff] %v741
    %758 = vst [vmem:[#allocation6 + $0x20] sm:$0xff] %v742
    %759 = vst [vmem:[#allocation6 + $0x28] sm:$0xff] %v743
    %760 = vst [vmem:[#allocation6 + $0x30] sm:$0xff] %v744
    %761 = vst [vmem:[#allocation6 + $0x38] sm:$0xff] %v745
    %762 = vst [vmem:[#allocation6 + $0x40] sm:$0xff] %v746
    %763 = vst [vmem:[#allocation6 + $0x48] sm:$0xff] %v747
    %764 = vst [vmem:[#allocation6 + $0x50] sm:$0xff] %v748
    %765 = vst [vmem:[#allocation6 + $0x58] sm:$0xff] %v749
    %766 = vst [vmem:[#allocation6 + $0x60] sm:$0xff] %v750
    %767 = vst [vmem:[#allocation6 + $0x68] sm:$0xff] %v751
    %768 = vst [vmem:[#allocation6 + $0x70] sm:$0xff] %v752
    %769 = vst [vmem:[#allocation6 + $0x78] sm:$0xff] %v753
    // Predicated region
    $region34: #{tpu_custom_call.1} parent=1 // pred_check
      _
    $region35: #{tpu_custom_call.1} parent=1 // pred_check_branch
      %771 = sbr.rel (0) target = $region37
    $region36: #{tpu_custom_call.1} parent=1 // pred_region
      %s773 = ssub.s32 2048, 2048
      %774 = vsyncadd [#allocation5], %s773
      %s775 = sshll.u32 [#allocation6], 4
      %s776 = int_to_ptr.vmem [resolvable:$true] %s775
      %781 = dma.vmem_to_hbm [thread:$0]  %s776, 2048, %s7, [#allocation5], 256, 256, 16
    $region37: #{tpu_custom_call.1} parent=1 // pred_fallthru
      _
    // Predicated region
    $region38: #{tpu_custom_call.1} parent=1 // pred_check
      _
    $region39: #{tpu_custom_call.1} parent=1 // pred_check_branch
      %783 = sbr.rel (0) target = $region41
    $region40: #{tpu_custom_call.1} parent=1 // pred_region
      %784 = dma.done [#allocation5], 2048
    $region41: #{tpu_custom_call.1} parent=1 // pred_fallthru
      _
    %785 = vsyncpa [#allocation4], 1
    %786 = vsyncpa [#allocation5], 1

</llo_original>
